<compile_context>
chip_gen: v7x
topology: tpu7x:2x2x1
jax: 0.10.0
libtpu: 0.0.40
codegen_flags: <defaults>
</compile_context>

<pallas_src>
import functools

import jax
import jax.numpy as jnp
from jax.experimental import pallas as pl
from jax.experimental.pallas import tpu as pltpu

# --- constants from the module ---
BONE_LIST = [[[1, -1, 0, 0, 0, 0, 0, 0, 0, 0, 0, 0, 0, 0, 0, 0, 0],
              [1, 0, 0, 0, -1, 0, 0, 0, 0, 0, 0, 0, 0, 0, 0, 0, 0],
              [1, 0, 0, 0, 0, 0, 0, -1, 0, 0, 0, 0, 0, 0, 0, 0, 0],
              [0, 1, -1, 0, 0, 0, 0, 0, 0, 0, 0, 0, 0, 0, 0, 0, 0],
              [0, 0, 1, -1, 0, 0, 0, 0, 0, 0, 0, 0, 0, 0, 0, 0, 0],
              [0, 0, 0, 0, 1, -1, 0, 0, 0, 0, 0, 0, 0, 0, 0, 0, 0],
              [0, 0, 0, 0, 0, 1, -1, 0, 0, 0, 0, 0, 0, 0, 0, 0, 0],
              [0, 0, 0, 0, 0, 0, 1, -1, 0, 0, 0, 0, 0, 0, 0, 0, 0],
              [0, 0, 0, 0, 0, 0, 0, 0, 1, -1, 0, 0, 0, 0, 0, 0, 0],
              [0, 0, 0, 0, 0, 0, 0, 0, 1, 0, 0, -1, 0, 0, 0, 0, 0],
              [0, 0, 0, 0, 0, 0, 0, 0, 1, 0, 0, 0, 0, 0, -1, 0, 0],
              [0, 0, 0, 0, 0, 0, 0, 0, 0, 0, 0, 1, -1, 0, 0, 0, 0],
              [0, 0, 0, 0, 0, 0, 0, 0, 0, 0, 0, 0, 1, -1, 0, 0, 0],
              [0, 0, 0, 0, 0, 0, 0, 0, 0, 0, 0, 0, 0, 0, 1, -1, 0],
              [0, 0, 0, 0, 0, 0, 0, 0, 0, 0, 0, 0, 0, 0, 0, 1, -1]]]

NUM_JOINTS = 17
NUM_XYZ = 3
NUM_BONE = 15                          # bone.shape[1]
IN_FEAT = NUM_JOINTS * NUM_XYZ         # 51
PSI_DIM = NUM_BONE * NUM_BONE          # 225 (flattened psi, PyTorch layout)
TRI_DIM = NUM_BONE * (NUM_BONE + 1) // 2   # 120 unique psi entries (i1 <= i2)
TRI_PAD = 128                          # lane-dense padding of the 120 entries
DIM = 256                              # hidden dim of the MLP (module default)


def _round_up(x, m):
    return ((x + m - 1) // m) * m


def _tri_indices():
    """Upper-triangular (i1 <= i2) index pairs, row-major."""
    i1, i2 = [], []
    for a in range(NUM_BONE):
        for b in range(a, NUM_BONE):
            i1.append(a)
            i2.append(b)
    return jnp.asarray(i1, jnp.int32), jnp.asarray(i2, jnp.int32)   # (120,) each


# ---------------------------------------------------------------------------
# One-time parameter prep (hoisted out of the per-call path)
#
#   bv  = joints(TB,51) @ KCS_MAT(51, 6*TRI_PAD)
#   psi = sum_k bv[:, U_k block] * bv[:, V_k block]          # (TB, TRI_PAD)
#
# with psi[:, tri(i1,i2)] = (B B^T)[i1,i2] for i1<=i2 and the last
# TRI_PAD-TRI_DIM lanes identically zero.  W1 is folded so that
# psi_tri @ W1_sym == psi_full @ W1 exactly.
# ---------------------------------------------------------------------------
def build_kcs_matrix(bone, dtype=jnp.bfloat16):
    bone = bone.astype(jnp.float32)                               # (15, 17)
    # A[:, 3*i+k] maps flat joints (51,) -> B[i, k]
    A = jnp.kron(bone.T, jnp.eye(NUM_XYZ, dtype=jnp.float32))     # (51, 45)
    i1, i2 = _tri_indices()
    pad = ((0, 0), (0, TRI_PAD - TRI_DIM))
    cols = []
    for k in range(NUM_XYZ):
        cols.append(jnp.pad(A[:, NUM_XYZ * i1 + k], pad))         # U_k (51, 128)
        cols.append(jnp.pad(A[:, NUM_XYZ * i2 + k], pad))         # V_k (51, 128)
    return jnp.concatenate(cols, axis=1).astype(dtype)            # (51, 768)


def fold_w1(w1):
    """Fold the (225, dim) Linear weight onto the 120 unique psi entries."""
    i1, i2 = _tri_indices()
    w_a = w1[NUM_BONE * i1 + i2]                                  # (120, dim)
    w_b = w1[NUM_BONE * i2 + i1]                                  # (120, dim)
    diag = (i1 == i2)[:, None]
    w_sym = jnp.where(diag, w_a, w_a + w_b)                       # exact fold
    return jnp.pad(w_sym, ((0, TRI_PAD - TRI_DIM), (0, 0)))       # (128, dim)


def prepare_params(bone, params, compute_dtype=jnp.bfloat16):
    """Build all kernel-ready arrays once (pad/fold/cast). Biases stay f32."""
    return {
        "kcs": build_kcs_matrix(bone, compute_dtype),             # (51, 768)
        "w1": fold_w1(params["w1"]).astype(compute_dtype),        # (128, dim)
        "b1": params["b1"].astype(jnp.float32),                   # (1, dim)
        "w2": params["w2"].astype(compute_dtype),                 # (dim, dim)
        "b2": params["b2"].astype(jnp.float32),
        "w3": params["w3"].astype(compute_dtype),                 # (dim, dim)
        "b3": params["b3"].astype(jnp.float32),
    }


# ---------------------------------------------------------------------------
# Fused kernel: KCS matrix + Linear(225->dim) + LeakyReLU + Res_Block(dim)
# ---------------------------------------------------------------------------
def kcs_mlp_kernel(j_ref, kcs_ref, w1_ref, b1_ref, w2_ref, b2_ref,
                   w3_ref, b3_ref, o_ref):
    cdt = kcs_ref.dtype          # MXU operand dtype (bf16 fast path or f32)

    def leaky(v):
        # LeakyReLU(0.2): max(v, 0.2*v) is exact for slope < 1
        return jnp.maximum(v, 0.2 * v)

    P = TRI_PAD
    j = j_ref[...].astype(cdt)                                    # (TB, 51)
    # TODO(synk): for TB > 1024 on v7x, split this into three (51, 2*P) matmuls
    # and consume each U_k*V_k pair immediately to cut peak bv VMEM ~3x.
    bv = jnp.dot(j, kcs_ref[...],
                 preferred_element_type=jnp.float32)              # (TB, 6*P) f32
    # psi multiply-accumulate stays in f32 (120 entries + 8 zero lanes).
    psi = (bv[:, 0 * P:1 * P] * bv[:, 1 * P:2 * P]
           + bv[:, 2 * P:3 * P] * bv[:, 3 * P:4 * P]
           + bv[:, 4 * P:5 * P] * bv[:, 5 * P:6 * P])             # (TB, 128) f32

    h = leaky(jnp.dot(psi.astype(cdt), w1_ref[...],
                      preferred_element_type=jnp.float32) + b1_ref[...])
    t = leaky(jnp.dot(h.astype(cdt), w2_ref[...],
                      preferred_element_type=jnp.float32) + b2_ref[...])
    t = jnp.dot(t.astype(cdt), w3_ref[...],
                preferred_element_type=jnp.float32) + b3_ref[...]
    o_ref[...] = leaky(h + t)


# ---------------------------------------------------------------------------
# Wrapper: batch tiling, padding, parameter plumbing
# ---------------------------------------------------------------------------
@functools.partial(jax.jit, static_argnames=("tile_batch",))
def kcs_layer_forward(joints, prep, *, tile_batch=1024):
    assert tile_batch % 8 == 0, "tile_batch must be a multiple of 8 (sublanes)"
    batch, feat = joints.shape
    assert feat == prep["kcs"].shape[0]
    dim = prep["w1"].shape[1]

    # Batch tile: multiple of 8, capped at tile_batch; choose it so the grid
    # has >= 2 steps whenever the batch allows (v7x has 2 TensorCores and the
    # batch axis is marked "parallel").
    batch8 = _round_up(batch, 8)
    if batch8 >= 16:
        tb = min(tile_batch, _round_up(pl.cdiv(batch8, 2), 8))
    else:
        tb = batch8
    padded = _round_up(batch, tb)
    if padded != batch:
        joints = jnp.pad(joints, ((0, padded - batch), (0, 0)))
    grid = (padded // tb,)

    resident = lambda shape: pl.BlockSpec(shape, lambda i: (0, 0))
    # TODO(synk): pipeline_mode=pl.Buffered(1) on the resident weight specs
    # would drop the duplicated weight buffers (~0.5 MiB); left default for
    # maximum compiler compatibility.

    # Explicit scoped-VMEM limit sized from the actual buffers (+headroom).
    wbytes = sum(int(prep[k].size) * prep[k].dtype.itemsize
                 for k in ("kcs", "w1", "b1", "w2", "b2", "w3", "b3"))
    act_bytes = (2 * tb * feat * 4          # joints tile (double-buffered)
                 + 2 * tb * dim * 4         # output tile (double-buffered)
                 + 6 * tb * TRI_PAD * 4     # bv intermediate (f32)
                 + 3 * tb * dim * 4)        # psi / h / t f32 intermediates
    vmem_limit = int(min(max(2 * (act_bytes + 2 * wbytes), 16 * 1024 * 1024),
                         64 * 1024 * 1024))

    flops = 2 * padded * (feat * 6 * TRI_PAD + TRI_PAD * dim + 2 * dim * dim)
    bytes_accessed = 4 * padded * (feat + dim) + wbytes

    out = pl.pallas_call(
        kcs_mlp_kernel,
        out_shape=jax.ShapeDtypeStruct((padded, dim), jnp.float32),
        grid=grid,
        in_specs=[
            pl.BlockSpec((tb, feat), lambda i: (i, 0)),            # joints tile
            resident((feat, 2 * NUM_XYZ * TRI_PAD)),               # KCS matrix
            resident((TRI_PAD, dim)), resident((1, dim)),          # W1_sym, b1
            resident((dim, dim)), resident((1, dim)),              # W2, b2
            resident((dim, dim)), resident((1, dim)),              # W3, b3
        ],
        out_specs=pl.BlockSpec((tb, dim), lambda i: (i, 0)),
        compiler_params=pltpu.CompilerParams(
            dimension_semantics=("parallel",),
            vmem_limit_bytes=vmem_limit),
        cost_estimate=pl.CostEstimate(flops=flops, transcendentals=0,
                                      bytes_accessed=bytes_accessed),
    )(joints, prep["kcs"], prep["w1"], prep["b1"], prep["w2"], prep["b2"],
      prep["w3"], prep["b3"])
    return out[:batch]


def init_params(key, dim=DIM):
    """Deterministic synthetic weights (shapes match the nn.Linear layers)."""
    k1, k2, k3, k4, k5, k6 = jax.random.split(key, 6)
    in_dim = PSI_DIM
    s1 = 1.0 / jnp.sqrt(in_dim)
    s2 = 1.0 / jnp.sqrt(dim)
    return {
        # stored as (in, out) so the kernel does x @ W + b
        "w1": jax.random.uniform(k1, (in_dim, dim), jnp.float32, -s1, s1),
        "b1": jax.random.uniform(k2, (1, dim), jnp.float32, -s1, s1),
        "w2": jax.random.uniform(k3, (dim, dim), jnp.float32, -s2, s2),
        "b2": jax.random.uniform(k4, (1, dim), jnp.float32, -s2, s2),
        "w3": jax.random.uniform(k5, (dim, dim), jnp.float32, -s2, s2),
        "b3": jax.random.uniform(k6, (1, dim), jnp.float32, -s2, s2),
    }


def reference_forward(joints, bone, params):
    """Pure-JAX reference mirroring the PyTorch forward, for verification."""
    batch = joints.shape[0]
    j = joints.reshape(batch, NUM_JOINTS, NUM_XYZ)
    B = jnp.einsum("ij,bjk->bik", bone, j, precision="highest")
    psi = jnp.einsum("bik,bjk->bij", B, B, precision="highest").reshape(batch, -1)
    leaky = lambda v: jnp.where(v >= 0, v, 0.2 * v)
    h = leaky(jnp.dot(psi, params["w1"], precision="highest") + params["b1"])
    t = leaky(jnp.dot(h, params["w2"], precision="highest") + params["b2"])
    t = jnp.dot(t, params["w3"], precision="highest") + params["b3"]
    return leaky(h + t)


if __name__ == "__main__":
    key = jax.random.PRNGKey(0)
    k_joints, k_params = jax.random.split(key)

    bone = jnp.asarray(BONE_LIST, dtype=jnp.float32)[0]            # (15, 17)
    params = init_params(k_params, DIM)

    # One-time host-side prep (hoisted out of the per-call path).
    prep_f32 = prepare_params(bone, params, compute_dtype=jnp.float32)
    prep_bf16 = prepare_params(bone, params, compute_dtype=jnp.bfloat16)

    # --- small single-tile check, f32 operands (parity with PyTorch math) ---
    batch = 4
    joints = jax.random.normal(k_joints, (batch, IN_FEAT), dtype=jnp.float32)
    ref = reference_forward(joints, bone, params)

    out_f32 = jax.block_until_ready(kcs_layer_forward(joints, prep_f32))
    assert out_f32.shape == (batch, DIM), out_f32.shape
    assert jnp.allclose(out_f32, ref, rtol=1e-3, atol=1e-3), (
        float(jnp.max(jnp.abs(out_f32 - ref))))

    # --- bf16-operand fast path (f32 accumulate), looser tolerance ---
    out_bf16 = jax.block_until_ready(kcs_layer_forward(joints, prep_bf16))
    scale = float(jnp.max(jnp.abs(ref)))
    err = float(jnp.max(jnp.abs(out_bf16 - ref)))
    assert err <= 3e-2 * (1.0 + scale), (err, scale)

    # --- multi-tile check (grid > 1, ragged last tile padded + sliced) ---
    batch2 = 20
    joints2 = jax.random.normal(jax.random.PRNGKey(1), (batch2, IN_FEAT),
                                dtype=jnp.float32)
    ref2 = reference_forward(joints2, bone, params)
    out2 = jax.block_until_ready(
        kcs_layer_forward(joints2, prep_bf16, tile_batch=8))
    assert out2.shape == (batch2, DIM), out2.shape
    scale2 = float(jnp.max(jnp.abs(ref2)))
    err2 = float(jnp.max(jnp.abs(out2 - ref2)))
    assert err2 <= 3e-2 * (1.0 + scale2), (err2, scale2)

    print("KERNEL_OK")
</pallas_src>

<mosaic_0001>
module attributes {stable_mosaic.version = 11 : i64} {
  func.func @kcs_mlp_kernel(%arg0: i32, %arg1: memref<8x51xf32, #tpu.memory_space<vmem>>, %arg2: memref<51x768xf32, #tpu.memory_space<vmem>>, %arg3: memref<128x256xf32, #tpu.memory_space<vmem>>, %arg4: memref<1x256xf32, #tpu.memory_space<vmem>>, %arg5: memref<256x256xf32, #tpu.memory_space<vmem>>, %arg6: memref<1x256xf32, #tpu.memory_space<vmem>>, %arg7: memref<256x256xf32, #tpu.memory_space<vmem>>, %arg8: memref<1x256xf32, #tpu.memory_space<vmem>>, %arg9: memref<8x256xf32, #tpu.memory_space<vmem>>) attributes {dimension_semantics = [#tpu.dimension_semantics<parallel>], iteration_bounds = array<i64: 1>, scalar_prefetch = 0 : i64, scratch_operands = 0 : i64, tpu.core_type = #tpu.core_type<tc>, window_params = [{transform_indices = @transform_0, window_bounds = array<i64: 8, 51>}, {pipeline_mode = #tpu.pipeline_mode<synchronous>, transform_indices = @transform_1, window_bounds = array<i64: 51, 768>}, {pipeline_mode = #tpu.pipeline_mode<synchronous>, transform_indices = @transform_2, window_bounds = array<i64: 128, 256>}, {pipeline_mode = #tpu.pipeline_mode<synchronous>, transform_indices = @transform_3, window_bounds = array<i64: 1, 256>}, {pipeline_mode = #tpu.pipeline_mode<synchronous>, transform_indices = @transform_4, window_bounds = array<i64: 256, 256>}, {pipeline_mode = #tpu.pipeline_mode<synchronous>, transform_indices = @transform_5, window_bounds = array<i64: 1, 256>}, {pipeline_mode = #tpu.pipeline_mode<synchronous>, transform_indices = @transform_6, window_bounds = array<i64: 256, 256>}, {pipeline_mode = #tpu.pipeline_mode<synchronous>, transform_indices = @transform_7, window_bounds = array<i64: 1, 256>}, {transform_indices = @transform_8, window_bounds = array<i64: 8, 256>}]} {
    %c0 = arith.constant 0 : index
    %c0_0 = arith.constant 0 : index
    %0 = vector.load %arg1[%c0, %c0_0] : memref<8x51xf32, #tpu.memory_space<vmem>>, vector<8x51xf32>
    %c0_1 = arith.constant 0 : index
    %c0_2 = arith.constant 0 : index
    %1 = vector.load %arg2[%c0_1, %c0_2] : memref<51x768xf32, #tpu.memory_space<vmem>>, vector<51x768xf32>
    %cst = arith.constant dense<0.000000e+00> : vector<8x768xf32>
    %2 = tpu.matmul %0, %1, %cst {dimension_numbers = #tpu.dot_dimension_numbers<[1], [0], [0], [1], [0, 0, 1, 1], [], []>} : vector<8x51xf32>, vector<51x768xf32>, vector<8x768xf32> -> vector<8x768xf32>
    %3 = vector.extract_strided_slice %2 {offsets = [0, 0], sizes = [8, 128], strides = [1, 1]} : vector<8x768xf32> to vector<8x128xf32>
    %4 = vector.extract_strided_slice %2 {offsets = [0, 128], sizes = [8, 128], strides = [1, 1]} : vector<8x768xf32> to vector<8x128xf32>
    %5 = arith.mulf %3, %4 : vector<8x128xf32>
    %6 = vector.extract_strided_slice %2 {offsets = [0, 256], sizes = [8, 128], strides = [1, 1]} : vector<8x768xf32> to vector<8x128xf32>
    %7 = vector.extract_strided_slice %2 {offsets = [0, 384], sizes = [8, 128], strides = [1, 1]} : vector<8x768xf32> to vector<8x128xf32>
    %8 = arith.mulf %6, %7 : vector<8x128xf32>
    %9 = arith.addf %5, %8 : vector<8x128xf32>
    %10 = vector.extract_strided_slice %2 {offsets = [0, 512], sizes = [8, 128], strides = [1, 1]} : vector<8x768xf32> to vector<8x128xf32>
    %11 = vector.extract_strided_slice %2 {offsets = [0, 640], sizes = [8, 128], strides = [1, 1]} : vector<8x768xf32> to vector<8x128xf32>
    %12 = arith.mulf %10, %11 : vector<8x128xf32>
    %13 = arith.addf %9, %12 : vector<8x128xf32>
    %c0_3 = arith.constant 0 : index
    %c0_4 = arith.constant 0 : index
    %14 = vector.load %arg3[%c0_3, %c0_4] : memref<128x256xf32, #tpu.memory_space<vmem>>, vector<128x256xf32>
    %cst_5 = arith.constant dense<0.000000e+00> : vector<8x256xf32>
    %15 = tpu.matmul %13, %14, %cst_5 {dimension_numbers = #tpu.dot_dimension_numbers<[1], [0], [0], [1], [0, 0, 1, 1], [], []>} : vector<8x128xf32>, vector<128x256xf32>, vector<8x256xf32> -> vector<8x256xf32>
    %c0_6 = arith.constant 0 : index
    %c0_7 = arith.constant 0 : index
    %16 = vector.load %arg4[%c0_6, %c0_7] : memref<1x256xf32, #tpu.memory_space<vmem>>, vector<1x256xf32>
    %17 = vector.broadcast %16 : vector<1x256xf32> to vector<8x256xf32>
    %18 = arith.addf %15, %17 : vector<8x256xf32>
    %cst_8 = arith.constant 2.000000e-01 : f32
    %19 = vector.broadcast %cst_8 : f32 to vector<8x256xf32>
    %20 = arith.mulf %19, %18 : vector<8x256xf32>
    %21 = arith.maximumf %18, %20 : vector<8x256xf32>
    %c0_9 = arith.constant 0 : index
    %c0_10 = arith.constant 0 : index
    %22 = vector.load %arg5[%c0_9, %c0_10] : memref<256x256xf32, #tpu.memory_space<vmem>>, vector<256x256xf32>
    %cst_11 = arith.constant dense<0.000000e+00> : vector<8x256xf32>
    %23 = tpu.matmul %21, %22, %cst_11 {dimension_numbers = #tpu.dot_dimension_numbers<[1], [0], [0], [1], [0, 0, 1, 1], [], []>} : vector<8x256xf32>, vector<256x256xf32>, vector<8x256xf32> -> vector<8x256xf32>
    %c0_12 = arith.constant 0 : index
    %c0_13 = arith.constant 0 : index
    %24 = vector.load %arg6[%c0_12, %c0_13] : memref<1x256xf32, #tpu.memory_space<vmem>>, vector<1x256xf32>
    %25 = vector.broadcast %24 : vector<1x256xf32> to vector<8x256xf32>
    %26 = arith.addf %23, %25 : vector<8x256xf32>
    %cst_14 = arith.constant 2.000000e-01 : f32
    %27 = vector.broadcast %cst_14 : f32 to vector<8x256xf32>
    %28 = arith.mulf %27, %26 : vector<8x256xf32>
    %29 = arith.maximumf %26, %28 : vector<8x256xf32>
    %c0_15 = arith.constant 0 : index
    %c0_16 = arith.constant 0 : index
    %30 = vector.load %arg7[%c0_15, %c0_16] : memref<256x256xf32, #tpu.memory_space<vmem>>, vector<256x256xf32>
    %cst_17 = arith.constant dense<0.000000e+00> : vector<8x256xf32>
    %31 = tpu.matmul %29, %30, %cst_17 {dimension_numbers = #tpu.dot_dimension_numbers<[1], [0], [0], [1], [0, 0, 1, 1], [], []>} : vector<8x256xf32>, vector<256x256xf32>, vector<8x256xf32> -> vector<8x256xf32>
    %c0_18 = arith.constant 0 : index
    %c0_19 = arith.constant 0 : index
    %32 = vector.load %arg8[%c0_18, %c0_19] : memref<1x256xf32, #tpu.memory_space<vmem>>, vector<1x256xf32>
    %33 = vector.broadcast %32 : vector<1x256xf32> to vector<8x256xf32>
    %34 = arith.addf %31, %33 : vector<8x256xf32>
    %35 = arith.addf %21, %34 : vector<8x256xf32>
    %cst_20 = arith.constant 2.000000e-01 : f32
    %36 = vector.broadcast %cst_20 : f32 to vector<8x256xf32>
    %37 = arith.mulf %36, %35 : vector<8x256xf32>
    %38 = arith.maximumf %35, %37 : vector<8x256xf32>
    %c0_21 = arith.constant 0 : index
    %c0_22 = arith.constant 0 : index
    %39 = vector.load %arg9[%c0_21, %c0_22] : memref<8x256xf32, #tpu.memory_space<vmem>>, vector<8x256xf32>
    tpu.vector_store %arg9[%c0_21, %c0_22], %38 {strides = array<i32>} : memref<8x256xf32, #tpu.memory_space<vmem>>, vector<8x256xf32>,
    return
  }
  func.func @transform_0(%arg0: i32) -> (i32, i32) {
    %c0_i32 = arith.constant 0 : i32
    %c0_i32_0 = arith.constant 0 : i32
    return %arg0, %c0_i32 : i32, i32
  }
  func.func @transform_1(%arg0: i32) -> (i32, i32) {
    %c0_i32 = arith.constant 0 : i32
    %c0_i32_0 = arith.constant 0 : i32
    %c0_i32_1 = arith.constant 0 : i32
    return %c0_i32, %c0_i32_0 : i32, i32
  }
  func.func @transform_2(%arg0: i32) -> (i32, i32) {
    %c0_i32 = arith.constant 0 : i32
    %c0_i32_0 = arith.constant 0 : i32
    %c0_i32_1 = arith.constant 0 : i32
    return %c0_i32, %c0_i32_0 : i32, i32
  }
  func.func @transform_3(%arg0: i32) -> (i32, i32) {
    %c0_i32 = arith.constant 0 : i32
    %c0_i32_0 = arith.constant 0 : i32
    %c0_i32_1 = arith.constant 0 : i32
    return %c0_i32, %c0_i32_0 : i32, i32
  }
  func.func @transform_4(%arg0: i32) -> (i32, i32) {
    %c0_i32 = arith.constant 0 : i32
    %c0_i32_0 = arith.constant 0 : i32
    %c0_i32_1 = arith.constant 0 : i32
    return %c0_i32, %c0_i32_0 : i32, i32
  }
  func.func @transform_5(%arg0: i32) -> (i32, i32) {
    %c0_i32 = arith.constant 0 : i32
    %c0_i32_0 = arith.constant 0 : i32
    %c0_i32_1 = arith.constant 0 : i32
    return %c0_i32, %c0_i32_0 : i32, i32
  }
  func.func @transform_6(%arg0: i32) -> (i32, i32) {
    %c0_i32 = arith.constant 0 : i32
    %c0_i32_0 = arith.constant 0 : i32
    %c0_i32_1 = arith.constant 0 : i32
    return %c0_i32, %c0_i32_0 : i32, i32
  }
  func.func @transform_7(%arg0: i32) -> (i32, i32) {
    %c0_i32 = arith.constant 0 : i32
    %c0_i32_0 = arith.constant 0 : i32
    %c0_i32_1 = arith.constant 0 : i32
    return %c0_i32, %c0_i32_0 : i32, i32
  }
  func.func @transform_8(%arg0: i32) -> (i32, i32) {
    %c0_i32 = arith.constant 0 : i32
    %c0_i32_0 = arith.constant 0 : i32
    return %arg0, %c0_i32 : i32, i32
  }
}

</mosaic_0001>

<llo_original>
// kernel: kcs_layer_forward.1
$region0: #{kcs_layer_forward.1}
  #allocation0 [shape = 'u32[]', space=smem, size = 0x4, offset = 0x4, fixed_abs, tag = 'smem constant byte address 0x4 - core index']
  #allocation1 [shape = 'u32[144,128]{1,0:T(1,128)}', space=vmem, size = 0x12000, scoped, tag = 'internal scratch']
  %s0 = inlined_call_operand.vmem [shape: f32[8,51], index: 0, kind: input, shape index: {}]
  %s1 = inlined_call_operand.hbm [shape: f32[51,768], index: 1, kind: input, shape index: {}]
  %s2 = inlined_call_operand.hbm [shape: f32[128,256], index: 2, kind: input, shape index: {}]
  %s3 = inlined_call_operand.vmem [shape: f32[1,256], index: 3, kind: input, shape index: {}]
  %s4 = inlined_call_operand.hbm [shape: f32[256,256], index: 4, kind: input, shape index: {}]
  %s5 = inlined_call_operand.vmem [shape: f32[1,256], index: 5, kind: input, shape index: {}]
  %s6 = inlined_call_operand.hbm [shape: f32[256,256], index: 6, kind: input, shape index: {}]
  %s7 = inlined_call_operand.vmem [shape: f32[1,256], index: 7, kind: input, shape index: {}]
  %s8 = inlined_call_operand.vmem [shape: f32[8,256], index: 8, kind: output, shape index: {}]
  %s9 = sld [smem:[#allocation0]]
  $region58: #{kcs_layer_forward.1} parent=0
    _
  %s11 = ssub.s32 1, %s9
  %s12 = scalar_select 0, %s11, %s9
  $region1: #{kcs_layer_forward.1} parent=0
    #allocation2 [shape = 'u8[172032]{0}', space=vmem, size = 0x2a000, scoped, tag = 'input window, operand 1, single buffered']
    #allocation3 [shape = 's32[1]{0}', space=sflag, size = 0x4, scoped, tag = 'scoped memory for kcs_layer_forward.1']
    #allocation4 [shape = 'u8[131072]{0}', space=vmem, size = 0x20000, scoped, tag = 'input window, operand 2, single buffered']
    #allocation5 [shape = 's32[1]{0}', space=sflag, size = 0x4, scoped, tag = 'scoped memory for kcs_layer_forward.1']
    #allocation6 [shape = 'u8[262144]{0}', space=vmem, size = 0x40000, scoped, tag = 'input window, operand 4, single buffered']
    #allocation7 [shape = 'u8[262144]{0}', space=vmem, size = 0x40000, scoped, tag = 'input window, operand 6, single buffered']
    #allocation8 [shape = 's32[1]{0}', space=sflag, size = 0x4, scoped, tag = 'scoped memory for kcs_layer_forward.1']
    %13 = vsyncpa [#allocation3], 0
    %14 = vsyncpa [#allocation5], 0
    %15 = vsyncpa [#allocation8], 0
    // Predicated region
    $region2: #{kcs_layer_forward.1} parent=1 // pred_check
      _
    $region3: #{kcs_layer_forward.1} parent=1 // pred_check_branch
      %17 = sbr.rel (0) target = $region5
    $region4: #{kcs_layer_forward.1} parent=1 // pred_region
      _
    $region5: #{kcs_layer_forward.1} parent=1 // pred_fallthru
      _
    // Predicated region
    $region6: #{kcs_layer_forward.1} parent=1 // pred_check
      _
    $region7: #{kcs_layer_forward.1} parent=1 // pred_check_branch
      %19 = sbr.rel (0) target = $region9
    $region8: #{kcs_layer_forward.1} parent=1 // pred_region
      %s21 = ssub.s32 5376, 5376
      %22 = vsyncadd [#allocation3], %s21
      %s23 = sshll.u32 [#allocation2], 4
      %s24 = int_to_ptr.vmem [resolvable:$true] %s23
      %29 = dma.hbm_to_vmem [thread:$0]  %s1, 5376, %s24, [#allocation3], 768, 768, 48
    $region9: #{kcs_layer_forward.1} parent=1 // pred_fallthru
      _
    // Predicated region
    $region10: #{kcs_layer_forward.1} parent=1 // pred_check
      _
    $region11: #{kcs_layer_forward.1} parent=1 // pred_check_branch
      %31 = sbr.rel (0) target = $region13
    $region12: #{kcs_layer_forward.1} parent=1 // pred_region
      %s33 = ssub.s32 4096, 4096
      %34 = vsyncadd [#allocation5], %s33
      %s35 = sshll.u32 [#allocation4], 4
      %s36 = int_to_ptr.vmem [resolvable:$true] %s35
      %41 = dma.hbm_to_vmem [thread:$0]  %s2, 4096, %s36, [#allocation5], 256, 256, 16
    $region13: #{kcs_layer_forward.1} parent=1 // pred_fallthru
      _
    // Predicated region
    $region14: #{kcs_layer_forward.1} parent=1 // pred_check
      _
    $region15: #{kcs_layer_forward.1} parent=1 // pred_check_branch
      %43 = sbr.rel (0) target = $region17
    $region16: #{kcs_layer_forward.1} parent=1 // pred_region
      _
    $region17: #{kcs_layer_forward.1} parent=1 // pred_fallthru
      _
    // Predicated region
    $region18: #{kcs_layer_forward.1} parent=1 // pred_check
      _
    $region19: #{kcs_layer_forward.1} parent=1 // pred_check_branch
      %45 = sbr.rel (0) target = $region21
    $region20: #{kcs_layer_forward.1} parent=1 // pred_region
      %s47 = ssub.s32 8192, 8192
      %48 = vsyncadd [#allocation5], %s47
      %s49 = sshll.u32 [#allocation6], 4
      %s50 = int_to_ptr.vmem [resolvable:$true] %s49
      %55 = dma.hbm_to_vmem [thread:$0]  %s4, 8192, %s50, [#allocation5], 256, 256, 16
    $region21: #{kcs_layer_forward.1} parent=1 // pred_fallthru
      _
    // Predicated region
    $region22: #{kcs_layer_forward.1} parent=1 // pred_check
      _
    $region23: #{kcs_layer_forward.1} parent=1 // pred_check_branch
      %57 = sbr.rel (0) target = $region25
    $region24: #{kcs_layer_forward.1} parent=1 // pred_region
      _
    $region25: #{kcs_layer_forward.1} parent=1 // pred_fallthru
      _
    // Predicated region
    $region26: #{kcs_layer_forward.1} parent=1 // pred_check
      _
    $region27: #{kcs_layer_forward.1} parent=1 // pred_check_branch
      %59 = sbr.rel (0) target = $region29
    $region28: #{kcs_layer_forward.1} parent=1 // pred_region
      %s61 = ssub.s32 8192, 8192
      %62 = vsyncadd [#allocation8], %s61
      %s63 = sshll.u32 [#allocation7], 4
      %s64 = int_to_ptr.vmem [resolvable:$true] %s63
      %69 = dma.hbm_to_vmem [thread:$0]  %s6, 8192, %s64, [#allocation8], 256, 256, 16
    $region29: #{kcs_layer_forward.1} parent=1 // pred_fallthru
      _
    // Predicated region
    $region30: #{kcs_layer_forward.1} parent=1 // pred_check
      _
    $region31: #{kcs_layer_forward.1} parent=1 // pred_check_branch
      %71 = sbr.rel (0) target = $region33
    $region32: #{kcs_layer_forward.1} parent=1 // pred_region
      _
    $region33: #{kcs_layer_forward.1} parent=1 // pred_fallthru
      _
    // Predicated region
    $region34: #{kcs_layer_forward.1} parent=1 // pred_check
      _
    $region35: #{kcs_layer_forward.1} parent=1 // pred_check_branch
      %73 = sbr.rel (0) target = $region37
    $region36: #{kcs_layer_forward.1} parent=1 // pred_region
      %74 = dma.done [#allocation3], 5376
    $region37: #{kcs_layer_forward.1} parent=1 // pred_fallthru
      _
    // Predicated region
    $region38: #{kcs_layer_forward.1} parent=1 // pred_check
      _
    $region39: #{kcs_layer_forward.1} parent=1 // pred_check_branch
      %76 = sbr.rel (0) target = $region41
    $region40: #{kcs_layer_forward.1} parent=1 // pred_region
      %77 = dma.done [#allocation5], 4096
    $region41: #{kcs_layer_forward.1} parent=1 // pred_fallthru
      _
    // Predicated region
    $region42: #{kcs_layer_forward.1} parent=1 // pred_check
      _
    $region43: #{kcs_layer_forward.1} parent=1 // pred_check_branch
      %79 = sbr.rel (0) target = $region45
    $region44: #{kcs_layer_forward.1} parent=1 // pred_region
      %80 = dma.done [#allocation5], 8192
    $region45: #{kcs_layer_forward.1} parent=1 // pred_fallthru
      _
    // Predicated region
    $region46: #{kcs_layer_forward.1} parent=1 // pred_check
      _
    $region47: #{kcs_layer_forward.1} parent=1 // pred_check_branch
      %82 = sbr.rel (0) target = $region49
    $region48: #{kcs_layer_forward.1} parent=1 // pred_region
      %83 = dma.done [#allocation8], 8192
    $region49: #{kcs_layer_forward.1} parent=1 // pred_fallthru
      _
    %v84 = vld [vmem:[%s0] sm:$0xff]
    %v85 = vld [vmem:[#allocation2] sm:$0xff]
    %v86 = vld [vmem:[#allocation2 + $0x8] sm:$0xff]
    %v87 = vld [vmem:[#allocation2 + $0x10] sm:$0xff]
    %v88 = vld [vmem:[#allocation2 + $0x18] sm:$0xff]
    %v89 = vld [vmem:[#allocation2 + $0x20] sm:$0xff]
    %v90 = vld [vmem:[#allocation2 + $0x28] sm:$0xff]
    %v91 = vld [vmem:[#allocation2 + $0x30] sm:$0xff]
    %v92 = vld [vmem:[#allocation2 + $0x38] sm:$0xff]
    %v93 = vld [vmem:[#allocation2 + $0x40] sm:$0xff]
    %v94 = vld [vmem:[#allocation2 + $0x48] sm:$0xff]
    %v95 = vld [vmem:[#allocation2 + $0x50] sm:$0xff]
    %v96 = vld [vmem:[#allocation2 + $0x58] sm:$0xff]
    %v97 = vld [vmem:[#allocation2 + $0x60] sm:$0xff]
    %v98 = vld [vmem:[#allocation2 + $0x68] sm:$0xff]
    %v99 = vld [vmem:[#allocation2 + $0x70] sm:$0xff]
    %v100 = vld [vmem:[#allocation2 + $0x78] sm:$0xff]
    %v101 = vld [vmem:[#allocation2 + $0x80] sm:$0xff]
    %v102 = vld [vmem:[#allocation2 + $0x88] sm:$0xff]
    %v103 = vld [vmem:[#allocation2 + $0x90] sm:$0xff]
    %v104 = vld [vmem:[#allocation2 + $0x98] sm:$0xff]
    %v105 = vld [vmem:[#allocation2 + $0xa0] sm:$0xff]
    %v106 = vld [vmem:[#allocation2 + $0xa8] sm:$0xff]
    %v107 = vld [vmem:[#allocation2 + $0xb0] sm:$0xff]
    %v108 = vld [vmem:[#allocation2 + $0xb8] sm:$0xff]
    %v109 = vld [vmem:[#allocation2 + $0xc0] sm:$0xff]
    %v110 = vld [vmem:[#allocation2 + $0xc8] sm:$0xff]
    %v111 = vld [vmem:[#allocation2 + $0xd0] sm:$0xff]
    %v112 = vld [vmem:[#allocation2 + $0xd8] sm:$0xff]
    %v113 = vld [vmem:[#allocation2 + $0xe0] sm:$0xff]
    %v114 = vld [vmem:[#allocation2 + $0xe8] sm:$0xff]
    %v115 = vld [vmem:[#allocation2 + $0xf0] sm:$0xff]
    %v116 = vld [vmem:[#allocation2 + $0xf8] sm:$0xff]
    %v117 = vld [vmem:[#allocation2 + $0x100] sm:$0xff]
    %v118 = vld [vmem:[#allocation2 + $0x108] sm:$0xff]
    %v119 = vld [vmem:[#allocation2 + $0x110] sm:$0xff]
    %v120 = vld [vmem:[#allocation2 + $0x118] sm:$0xff]
    %v121 = vld [vmem:[#allocation2 + $0x120] sm:$0x7]
    %v122 = vld [vmem:[#allocation2 + $0x128] sm:$0x7]
    %v123 = vld [vmem:[#allocation2 + $0x130] sm:$0x7]
    %v124 = vld [vmem:[#allocation2 + $0x138] sm:$0x7]
    %v125 = vld [vmem:[#allocation2 + $0x140] sm:$0x7]
    %v126 = vld [vmem:[#allocation2 + $0x148] sm:$0x7]
    %vm127 = vcmask 416768
    %v129 = vsel %vm127, %v84, 0
    %vm131 = vcmask 1042432
    %v133 = vsel %vm131, %v121, 0
    %v136 = vsel %vm131, %v122, 0
    %v139 = vsel %vm131, %v123, 0
    %v142 = vsel %vm131, %v124, 0
    %v145 = vsel %vm131, %v125, 0
    %v148 = vsel %vm131, %v126, 0
    %150 = vmatprep.subr.mxu0 %v86
    %151 = vmatpush1.msra.mxu0 %v85
    %152 = vmatprep.subr.mxu0 %v92
    %153 = vmatpush1.msra.mxu0 %v91
    %154 = vmatprep.subr.mxu0 %v98
    %155 = vmatpush1.msra.mxu0 %v97
    %156 = vmatprep.subr.mxu0 %v104
    %157 = vmatpush1.msra.mxu0 %v103
    %158 = vmatprep.subr.mxu0 %v110
    %159 = vmatpush1.msra.mxu0 %v109
    %160 = vmatprep.subr.mxu0 %v116
    %161 = vmatpush1.msra.mxu0 %v115
    %162 = vmatprep.subr.mxu0 %v136
    %163 = vmatpush1.msra.mxu0 %v133
    %164 = vmatprep.subr.mxu0 0.0
    %165 = vmatpush1.msra.mxu0 0.0
    %166 = vmatprep.subr.mxu0 0.0
    %167 = vmatpush1.msra.mxu0 0.0
    %168 = vmatprep.subr.mxu0 0.0
    %169 = vmatpush1.msra.mxu0 0.0
    %170 = vmatprep.subr.mxu0 0.0
    %171 = vmatpush1.msra.mxu0 0.0
    %172 = vmatprep.subr.mxu0 0.0
    %173 = vmatpush1.msra.mxu0 0.0
    %174 = vmatprep.subr.mxu0 0.0
    %175 = vmatpush1.msra.mxu0 0.0
    %176 = vmatprep.subr.mxu0 0.0
    %177 = vmatpush1.msra.mxu0 0.0
    %178 = vmatprep.subr.mxu0 0.0
    %179 = vmatpush1.msra.mxu0 0.0
    %180 = vmatprep.subr.mxu0 0.0
    %181 = vmatpush1.msra.mxu0 0.0
    %182 = vmatprep.subr.mxu0 0.0
    %183 = vmatpush1.msra.mxu0 0.0
    %184 = vmatprep.subr.mxu0 0.0
    %185 = vmatpush1.msra.mxu0 0.0
    %186 = vmatprep.subr.mxu0 0.0
    %187 = vmatpush1.msra.mxu0 0.0
    %188 = vmatprep.subr.mxu0 0.0
    %189 = vmatpush1.msra.mxu0 0.0
    %190 = vmatprep.subr.mxu0 0.0
    %191 = vmatpush1.msra.mxu0 0.0
    %192 = vmatprep.subr.mxu0 0.0
    %193 = vmatpush1.msra.mxu0 0.0
    %194 = vmatprep.subr.mxu0 0.0
    %195 = vmatpush1.msra.mxu0 0.0
    %196 = vmatprep.subr.mxu0 0.0
    %197 = vmatpush1.msra.mxu0 0.0
    %198 = vmatprep.subr.mxu0 0.0
    %199 = vmatpush1.msra.mxu0 0.0
    %200 = vmatprep.subr.mxu0 0.0
    %201 = vmatpush1.msra.mxu0 0.0
    %202 = vmatprep.subr.mxu0 0.0
    %203 = vmatpush1.msra.mxu0 0.0
    %204 = vmatprep.subr.mxu0 0.0
    %205 = vmatpush1.msra.mxu0 0.0
    %206 = vmatprep.subr.mxu0 0.0
    %207 = vmatpush1.msra.mxu0 0.0
    %208 = vmatprep.subr.mxu0 0.0
    %209 = vmatpush1.msra.mxu0 0.0
    %210 = vmatprep.subr.mxu0 0.0
    %211 = vmatpush1.msra.mxu0 0.0
    %212 = vmatprep.subr.mxu0 0.0
    %213 = vmatpush1.msra.mxu0 0.0
    %214 = vmatprep.mubr.f32.mxu0 0.0
    %215 = vmatmul.mubr.f32.gmra.mrb[0].mxu0 %v129
    %v216 = vpop.f32.mrb[0].mxu0
    %v217 = vadd.f32 0.0, %v216
    %v218 = vpop.f32.mrb[0].mxu0
    %v219 = vadd.f32 0.0, %v218
    %220 = vdwg.mxu0
    %221 = vmatprep.subr.mxu0 %v88
    %222 = vmatpush1.msra.mxu0 %v87
    %223 = vmatprep.subr.mxu0 %v94
    %224 = vmatpush1.msra.mxu0 %v93
    %225 = vmatprep.subr.mxu0 %v100
    %226 = vmatpush1.msra.mxu0 %v99
    %227 = vmatprep.subr.mxu0 %v106
    %228 = vmatpush1.msra.mxu0 %v105
    %229 = vmatprep.subr.mxu0 %v112
    %230 = vmatpush1.msra.mxu0 %v111
    %231 = vmatprep.subr.mxu0 %v118
    %232 = vmatpush1.msra.mxu0 %v117
    %233 = vmatprep.subr.mxu0 %v142
    %234 = vmatpush1.msra.mxu0 %v139
    %235 = vmatprep.subr.mxu0 0.0
    %236 = vmatpush1.msra.mxu0 0.0
    %237 = vmatprep.subr.mxu0 0.0
    %238 = vmatpush1.msra.mxu0 0.0
    %239 = vmatprep.subr.mxu0 0.0
    %240 = vmatpush1.msra.mxu0 0.0
    %241 = vmatprep.subr.mxu0 0.0
    %242 = vmatpush1.msra.mxu0 0.0
    %243 = vmatprep.subr.mxu0 0.0
    %244 = vmatpush1.msra.mxu0 0.0
    %245 = vmatprep.subr.mxu0 0.0
    %246 = vmatpush1.msra.mxu0 0.0
    %247 = vmatprep.subr.mxu0 0.0
    %248 = vmatpush1.msra.mxu0 0.0
    %249 = vmatprep.subr.mxu0 0.0
    %250 = vmatpush1.msra.mxu0 0.0
    %251 = vmatprep.subr.mxu0 0.0
    %252 = vmatpush1.msra.mxu0 0.0
    %253 = vmatprep.subr.mxu0 0.0
    %254 = vmatpush1.msra.mxu0 0.0
    %255 = vmatprep.subr.mxu0 0.0
    %256 = vmatpush1.msra.mxu0 0.0
    %257 = vmatprep.subr.mxu0 0.0
    %258 = vmatpush1.msra.mxu0 0.0
    %259 = vmatprep.subr.mxu0 0.0
    %260 = vmatpush1.msra.mxu0 0.0
    %261 = vmatprep.subr.mxu0 0.0
    %262 = vmatpush1.msra.mxu0 0.0
    %263 = vmatprep.subr.mxu0 0.0
    %264 = vmatpush1.msra.mxu0 0.0
    %265 = vmatprep.subr.mxu0 0.0
    %266 = vmatpush1.msra.mxu0 0.0
    %267 = vmatprep.subr.mxu0 0.0
    %268 = vmatpush1.msra.mxu0 0.0
    %269 = vmatprep.subr.mxu0 0.0
    %270 = vmatpush1.msra.mxu0 0.0
    %271 = vmatprep.subr.mxu0 0.0
    %272 = vmatpush1.msra.mxu0 0.0
    %273 = vmatprep.subr.mxu0 0.0
    %274 = vmatpush1.msra.mxu0 0.0
    %275 = vmatprep.subr.mxu0 0.0
    %276 = vmatpush1.msra.mxu0 0.0
    %277 = vmatprep.subr.mxu0 0.0
    %278 = vmatpush1.msra.mxu0 0.0
    %279 = vmatprep.subr.mxu0 0.0
    %280 = vmatpush1.msra.mxu0 0.0
    %281 = vmatprep.subr.mxu0 0.0
    %282 = vmatpush1.msra.mxu0 0.0
    %283 = vmatprep.subr.mxu0 0.0
    %284 = vmatpush1.msra.mxu0 0.0
    %285 = vmatprep.mubr.f32.mxu0 0.0
    %286 = vmatmul.mubr.f32.gmra.mrb[0].mxu0 %v129
    %v287 = vpop.f32.mrb[0].mxu0
    %v288 = vadd.f32 0.0, %v287
    %v289 = vpop.f32.mrb[0].mxu0
    %v290 = vadd.f32 0.0, %v289
    %291 = vdwg.mxu0
    %292 = vmatprep.subr.mxu0 %v90
    %293 = vmatpush1.msra.mxu0 %v89
    %294 = vmatprep.subr.mxu0 %v96
    %295 = vmatpush1.msra.mxu0 %v95
    %296 = vmatprep.subr.mxu0 %v102
    %297 = vmatpush1.msra.mxu0 %v101
    %298 = vmatprep.subr.mxu0 %v108
    %299 = vmatpush1.msra.mxu0 %v107
    %300 = vmatprep.subr.mxu0 %v114
    %301 = vmatpush1.msra.mxu0 %v113
    %302 = vmatprep.subr.mxu0 %v120
    %303 = vmatpush1.msra.mxu0 %v119
    %304 = vmatprep.subr.mxu0 %v148
    %305 = vmatpush1.msra.mxu0 %v145
    %306 = vmatprep.subr.mxu0 0.0
    %307 = vmatpush1.msra.mxu0 0.0
    %308 = vmatprep.subr.mxu0 0.0
    %309 = vmatpush1.msra.mxu0 0.0
    %310 = vmatprep.subr.mxu0 0.0
    %311 = vmatpush1.msra.mxu0 0.0
    %312 = vmatprep.subr.mxu0 0.0
    %313 = vmatpush1.msra.mxu0 0.0
    %314 = vmatprep.subr.mxu0 0.0
    %315 = vmatpush1.msra.mxu0 0.0
    %316 = vmatprep.subr.mxu0 0.0
    %317 = vmatpush1.msra.mxu0 0.0
    %318 = vmatprep.subr.mxu0 0.0
    %319 = vmatpush1.msra.mxu0 0.0
    %320 = vmatprep.subr.mxu0 0.0
    %321 = vmatpush1.msra.mxu0 0.0
    %322 = vmatprep.subr.mxu0 0.0
    %323 = vmatpush1.msra.mxu0 0.0
    %324 = vmatprep.subr.mxu0 0.0
    %325 = vmatpush1.msra.mxu0 0.0
    %326 = vmatprep.subr.mxu0 0.0
    %327 = vmatpush1.msra.mxu0 0.0
    %328 = vmatprep.subr.mxu0 0.0
    %329 = vmatpush1.msra.mxu0 0.0
    %330 = vmatprep.subr.mxu0 0.0
    %331 = vmatpush1.msra.mxu0 0.0
    %332 = vmatprep.subr.mxu0 0.0
    %333 = vmatpush1.msra.mxu0 0.0
    %334 = vmatprep.subr.mxu0 0.0
    %335 = vmatpush1.msra.mxu0 0.0
    %336 = vmatprep.subr.mxu0 0.0
    %337 = vmatpush1.msra.mxu0 0.0
    %338 = vmatprep.subr.mxu0 0.0
    %339 = vmatpush1.msra.mxu0 0.0
    %340 = vmatprep.subr.mxu0 0.0
    %341 = vmatpush1.msra.mxu0 0.0
    %342 = vmatprep.subr.mxu0 0.0
    %343 = vmatpush1.msra.mxu0 0.0
    %344 = vmatprep.subr.mxu0 0.0
    %345 = vmatpush1.msra.mxu0 0.0
    %346 = vmatprep.subr.mxu0 0.0
    %347 = vmatpush1.msra.mxu0 0.0
    %348 = vmatprep.subr.mxu0 0.0
    %349 = vmatpush1.msra.mxu0 0.0
    %350 = vmatprep.subr.mxu0 0.0
    %351 = vmatpush1.msra.mxu0 0.0
    %352 = vmatprep.subr.mxu0 0.0
    %353 = vmatpush1.msra.mxu0 0.0
    %354 = vmatprep.subr.mxu0 0.0
    %355 = vmatpush1.msra.mxu0 0.0
    %356 = vmatprep.mubr.f32.mxu0 0.0
    %357 = vmatmul.mubr.f32.gmra.mrb[0].mxu0 %v129
    %v358 = vpop.f32.mrb[0].mxu0
    %v359 = vadd.f32 0.0, %v358
    %v360 = vpop.f32.mrb[0].mxu0
    %v361 = vadd.f32 0.0, %v360
    %362 = vdwg.mxu0
    %v363 = vmul.f32 %v217, %v219
    %v364 = vmul.f32 %v288, %v290
    %v365 = vadd.f32 %v363, %v364
    %v366 = vmul.f32 %v359, %v361
    %v367 = vadd.f32 %v365, %v366
    %v368 = vld [vmem:[#allocation4] sm:$0xff]
    %v369 = vld [vmem:[#allocation4 + $0x8] sm:$0xff]
    %v370 = vld [vmem:[#allocation4 + $0x10] sm:$0xff]
    %v371 = vld [vmem:[#allocation4 + $0x18] sm:$0xff]
    %v372 = vld [vmem:[#allocation4 + $0x20] sm:$0xff]
    %v373 = vld [vmem:[#allocation4 + $0x28] sm:$0xff]
    %v374 = vld [vmem:[#allocation4 + $0x30] sm:$0xff]
    %v375 = vld [vmem:[#allocation4 + $0x38] sm:$0xff]
    %v376 = vld [vmem:[#allocation4 + $0x40] sm:$0xff]
    %v377 = vld [vmem:[#allocation4 + $0x48] sm:$0xff]
    %v378 = vld [vmem:[#allocation4 + $0x50] sm:$0xff]
    %v379 = vld [vmem:[#allocation4 + $0x58] sm:$0xff]
    %v380 = vld [vmem:[#allocation4 + $0x60] sm:$0xff]
    %v381 = vld [vmem:[#allocation4 + $0x68] sm:$0xff]
    %v382 = vld [vmem:[#allocation4 + $0x70] sm:$0xff]
    %v383 = vld [vmem:[#allocation4 + $0x78] sm:$0xff]
    %v384 = vld [vmem:[#allocation4 + $0x80] sm:$0xff]
    %v385 = vld [vmem:[#allocation4 + $0x88] sm:$0xff]
    %v386 = vld [vmem:[#allocation4 + $0x90] sm:$0xff]
    %v387 = vld [vmem:[#allocation4 + $0x98] sm:$0xff]
    %v388 = vld [vmem:[#allocation4 + $0xa0] sm:$0xff]
    %v389 = vld [vmem:[#allocation4 + $0xa8] sm:$0xff]
    %v390 = vld [vmem:[#allocation4 + $0xb0] sm:$0xff]
    %v391 = vld [vmem:[#allocation4 + $0xb8] sm:$0xff]
    %v392 = vld [vmem:[#allocation4 + $0xc0] sm:$0xff]
    %v393 = vld [vmem:[#allocation4 + $0xc8] sm:$0xff]
    %v394 = vld [vmem:[#allocation4 + $0xd0] sm:$0xff]
    %v395 = vld [vmem:[#allocation4 + $0xd8] sm:$0xff]
    %v396 = vld [vmem:[#allocation4 + $0xe0] sm:$0xff]
    %v397 = vld [vmem:[#allocation4 + $0xe8] sm:$0xff]
    %v398 = vld [vmem:[#allocation4 + $0xf0] sm:$0xff]
    %v399 = vld [vmem:[#allocation4 + $0xf8] sm:$0xff]
    %v400 = vld [vmem:[%s3] sm:$0x3]
    %v402 = vlaneseq
    %v403 = vshrl.u32 %v402, 7
    %v404 = vsub.s32 0, %v403
    %v405 = vrot.slane %v400, %v404
    %v406 = vlaneseq
    %v407 = vshrl.u32 %v406, 7
    %v408 = vsub.s32 1, %v407
    %v409 = vrot.slane %v400, %v408
    %412 = vmatprep.subr.mxu0 %v369
    %413 = vmatpush1.msra.mxu0 %v368
    %414 = vmatprep.subr.mxu0 %v371
    %415 = vmatpush1.msra.mxu0 %v370
    %416 = vmatprep.subr.mxu0 %v373
    %417 = vmatpush1.msra.mxu0 %v372
    %418 = vmatprep.subr.mxu0 %v375
    %419 = vmatpush1.msra.mxu0 %v374
    %420 = vmatprep.subr.mxu0 %v377
    %421 = vmatpush1.msra.mxu0 %v376
    %422 = vmatprep.subr.mxu0 %v379
    %423 = vmatpush1.msra.mxu0 %v378
    %424 = vmatprep.subr.mxu0 %v381
    %425 = vmatpush1.msra.mxu0 %v380
    %426 = vmatprep.subr.mxu0 %v383
    %427 = vmatpush1.msra.mxu0 %v382
    %428 = vmatprep.subr.mxu0 %v385
    %429 = vmatpush1.msra.mxu0 %v384
    %430 = vmatprep.subr.mxu0 %v387
    %431 = vmatpush1.msra.mxu0 %v386
    %432 = vmatprep.subr.mxu0 %v389
    %433 = vmatpush1.msra.mxu0 %v388
    %434 = vmatprep.subr.mxu0 %v391
    %435 = vmatpush1.msra.mxu0 %v390
    %436 = vmatprep.subr.mxu0 %v393
    %437 = vmatpush1.msra.mxu0 %v392
    %438 = vmatprep.subr.mxu0 %v395
    %439 = vmatpush1.msra.mxu0 %v394
    %440 = vmatprep.subr.mxu0 %v397
    %441 = vmatpush1.msra.mxu0 %v396
    %442 = vmatprep.subr.mxu0 %v399
    %443 = vmatpush1.msra.mxu0 %v398
    %444 = vmatprep.subr.mxu0 0.0
    %445 = vmatpush1.msra.mxu0 0.0
    %446 = vmatprep.subr.mxu0 0.0
    %447 = vmatpush1.msra.mxu0 0.0
    %448 = vmatprep.subr.mxu0 0.0
    %449 = vmatpush1.msra.mxu0 0.0
    %450 = vmatprep.subr.mxu0 0.0
    %451 = vmatpush1.msra.mxu0 0.0
    %452 = vmatprep.subr.mxu0 0.0
    %453 = vmatpush1.msra.mxu0 0.0
    %454 = vmatprep.subr.mxu0 0.0
    %455 = vmatpush1.msra.mxu0 0.0
    %456 = vmatprep.subr.mxu0 0.0
    %457 = vmatpush1.msra.mxu0 0.0
    %458 = vmatprep.subr.mxu0 0.0
    %459 = vmatpush1.msra.mxu0 0.0
    %460 = vmatprep.subr.mxu0 0.0
    %461 = vmatpush1.msra.mxu0 0.0
    %462 = vmatprep.subr.mxu0 0.0
    %463 = vmatpush1.msra.mxu0 0.0
    %464 = vmatprep.subr.mxu0 0.0
    %465 = vmatpush1.msra.mxu0 0.0
    %466 = vmatprep.subr.mxu0 0.0
    %467 = vmatpush1.msra.mxu0 0.0
    %468 = vmatprep.subr.mxu0 0.0
    %469 = vmatpush1.msra.mxu0 0.0
    %470 = vmatprep.subr.mxu0 0.0
    %471 = vmatpush1.msra.mxu0 0.0
    %472 = vmatprep.subr.mxu0 0.0
    %473 = vmatpush1.msra.mxu0 0.0
    %474 = vmatprep.subr.mxu0 0.0
    %475 = vmatpush1.msra.mxu0 0.0
    %476 = vmatprep.mubr.f32.mxu0 0.0
    %477 = vmatmul.mubr.f32.gmra.mrb[0].mxu0 %v367
    %v478 = vpop.f32.mrb[0].mxu0
    %v479 = vadd.f32 %v405, %v478
    %v480 = vpop.f32.mrb[0].mxu0
    %v481 = vadd.f32 %v409, %v480
    %482 = vdwg.mxu0
    %v483 = vmul.f32 %v479, 0.2
    %v484 = vmul.f32 %v481, 0.2
    %v485 = vmax.f32 %v479, %v483
    %v486 = vmax.f32 %v481, %v484
    %v487 = vld [vmem:[#allocation6] sm:$0xff]
    %v488 = vld [vmem:[#allocation6 + $0x8] sm:$0xff]
    %v489 = vld [vmem:[#allocation6 + $0x10] sm:$0xff]
    %v490 = vld [vmem:[#allocation6 + $0x18] sm:$0xff]
    %v491 = vld [vmem:[#allocation6 + $0x20] sm:$0xff]
    %v492 = vld [vmem:[#allocation6 + $0x28] sm:$0xff]
    %v493 = vld [vmem:[#allocation6 + $0x30] sm:$0xff]
    %v494 = vld [vmem:[#allocation6 + $0x38] sm:$0xff]
    %v495 = vld [vmem:[#allocation6 + $0x40] sm:$0xff]
    %v496 = vld [vmem:[#allocation6 + $0x48] sm:$0xff]
    %v497 = vld [vmem:[#allocation6 + $0x50] sm:$0xff]
    %v498 = vld [vmem:[#allocation6 + $0x58] sm:$0xff]
    %v499 = vld [vmem:[#allocation6 + $0x60] sm:$0xff]
    %v500 = vld [vmem:[#allocation6 + $0x68] sm:$0xff]
    %v501 = vld [vmem:[#allocation6 + $0x70] sm:$0xff]
    %v502 = vld [vmem:[#allocation6 + $0x78] sm:$0xff]
    %v503 = vld [vmem:[#allocation6 + $0x80] sm:$0xff]
    %v504 = vld [vmem:[#allocation6 + $0x88] sm:$0xff]
    %v505 = vld [vmem:[#allocation6 + $0x90] sm:$0xff]
    %v506 = vld [vmem:[#allocation6 + $0x98] sm:$0xff]
    %v507 = vld [vmem:[#allocation6 + $0xa0] sm:$0xff]
    %v508 = vld [vmem:[#allocation6 + $0xa8] sm:$0xff]
    %v509 = vld [vmem:[#allocation6 + $0xb0] sm:$0xff]
    %v510 = vld [vmem:[#allocation6 + $0xb8] sm:$0xff]
    %v511 = vld [vmem:[#allocation6 + $0xc0] sm:$0xff]
    %v512 = vld [vmem:[#allocation6 + $0xc8] sm:$0xff]
    %v513 = vld [vmem:[#allocation6 + $0xd0] sm:$0xff]
    %v514 = vld [vmem:[#allocation6 + $0xd8] sm:$0xff]
    %v515 = vld [vmem:[#allocation6 + $0xe0] sm:$0xff]
    %v516 = vld [vmem:[#allocation6 + $0xe8] sm:$0xff]
    %v517 = vld [vmem:[#allocation6 + $0xf0] sm:$0xff]
    %v518 = vld [vmem:[#allocation6 + $0xf8] sm:$0xff]
    %v519 = vld [vmem:[#allocation6 + $0x100] sm:$0xff]
    %v520 = vld [vmem:[#allocation6 + $0x108] sm:$0xff]
    %v521 = vld [vmem:[#allocation6 + $0x110] sm:$0xff]
    %v522 = vld [vmem:[#allocation6 + $0x118] sm:$0xff]
    %v523 = vld [vmem:[#allocation6 + $0x120] sm:$0xff]
    %v524 = vld [vmem:[#allocation6 + $0x128] sm:$0xff]
    %v525 = vld [vmem:[#allocation6 + $0x130] sm:$0xff]
    %v526 = vld [vmem:[#allocation6 + $0x138] sm:$0xff]
    %v527 = vld [vmem:[#allocation6 + $0x140] sm:$0xff]
    %v528 = vld [vmem:[#allocation6 + $0x148] sm:$0xff]
    %v529 = vld [vmem:[#allocation6 + $0x150] sm:$0xff]
    %v530 = vld [vmem:[#allocation6 + $0x158] sm:$0xff]
    %v531 = vld [vmem:[#allocation6 + $0x160] sm:$0xff]
    %v532 = vld [vmem:[#allocation6 + $0x168] sm:$0xff]
    %v533 = vld [vmem:[#allocation6 + $0x170] sm:$0xff]
    %v534 = vld [vmem:[#allocation6 + $0x178] sm:$0xff]
    %v535 = vld [vmem:[#allocation6 + $0x180] sm:$0xff]
    %v536 = vld [vmem:[#allocation6 + $0x188] sm:$0xff]
    %v537 = vld [vmem:[#allocation6 + $0x190] sm:$0xff]
    %v538 = vld [vmem:[#allocation6 + $0x198] sm:$0xff]
    %v539 = vld [vmem:[#allocation6 + $0x1a0] sm:$0xff]
    %v540 = vld [vmem:[#allocation6 + $0x1a8] sm:$0xff]
    %v541 = vld [vmem:[#allocation6 + $0x1b0] sm:$0xff]
    %v542 = vld [vmem:[#allocation6 + $0x1b8] sm:$0xff]
    %v543 = vld [vmem:[#allocation6 + $0x1c0] sm:$0xff]
    %v544 = vld [vmem:[#allocation6 + $0x1c8] sm:$0xff]
    %v545 = vld [vmem:[#allocation6 + $0x1d0] sm:$0xff]
    %v546 = vld [vmem:[#allocation6 + $0x1d8] sm:$0xff]
    %v547 = vld [vmem:[#allocation6 + $0x1e0] sm:$0xff]
    %v548 = vld [vmem:[#allocation6 + $0x1e8] sm:$0xff]
    %v549 = vld [vmem:[#allocation6 + $0x1f0] sm:$0xff]
    %v550 = vld [vmem:[#allocation6 + $0x1f8] sm:$0xff]
    %v551 = vld [vmem:[%s5] sm:$0x3]
    %v553 = vlaneseq
    %v554 = vshrl.u32 %v553, 7
    %v555 = vsub.s32 0, %v554
    %v556 = vrot.slane %v551, %v555
    %v557 = vlaneseq
    %v558 = vshrl.u32 %v557, 7
    %v559 = vsub.s32 1, %v558
    %v560 = vrot.slane %v551, %v559
    %563 = vmatprep.subr.mxu0 %v488
    %564 = vmatpush1.msra.mxu0 %v487
    %565 = vmatprep.subr.mxu0 %v490
    %566 = vmatpush1.msra.mxu0 %v489
    %567 = vmatprep.subr.mxu0 %v492
    %568 = vmatpush1.msra.mxu0 %v491
    %569 = vmatprep.subr.mxu0 %v494
    %570 = vmatpush1.msra.mxu0 %v493
    %571 = vmatprep.subr.mxu0 %v496
    %572 = vmatpush1.msra.mxu0 %v495
    %573 = vmatprep.subr.mxu0 %v498
    %574 = vmatpush1.msra.mxu0 %v497
    %575 = vmatprep.subr.mxu0 %v500
    %576 = vmatpush1.msra.mxu0 %v499
    %577 = vmatprep.subr.mxu0 %v502
    %578 = vmatpush1.msra.mxu0 %v501
    %579 = vmatprep.subr.mxu0 %v504
    %580 = vmatpush1.msra.mxu0 %v503
    %581 = vmatprep.subr.mxu0 %v506
    %582 = vmatpush1.msra.mxu0 %v505
    %583 = vmatprep.subr.mxu0 %v508
    %584 = vmatpush1.msra.mxu0 %v507
    %585 = vmatprep.subr.mxu0 %v510
    %586 = vmatpush1.msra.mxu0 %v509
    %587 = vmatprep.subr.mxu0 %v512
    %588 = vmatpush1.msra.mxu0 %v511
    %589 = vmatprep.subr.mxu0 %v514
    %590 = vmatpush1.msra.mxu0 %v513
    %591 = vmatprep.subr.mxu0 %v516
    %592 = vmatpush1.msra.mxu0 %v515
    %593 = vmatprep.subr.mxu0 %v518
    %594 = vmatpush1.msra.mxu0 %v517
    %595 = vmatprep.subr.mxu0 %v520
    %596 = vmatpush1.msra.mxu0 %v519
    %597 = vmatprep.subr.mxu0 %v522
    %598 = vmatpush1.msra.mxu0 %v521
    %599 = vmatprep.subr.mxu0 %v524
    %600 = vmatpush1.msra.mxu0 %v523
    %601 = vmatprep.subr.mxu0 %v526
    %602 = vmatpush1.msra.mxu0 %v525
    %603 = vmatprep.subr.mxu0 %v528
    %604 = vmatpush1.msra.mxu0 %v527
    %605 = vmatprep.subr.mxu0 %v530
    %606 = vmatpush1.msra.mxu0 %v529
    %607 = vmatprep.subr.mxu0 %v532
    %608 = vmatpush1.msra.mxu0 %v531
    %609 = vmatprep.subr.mxu0 %v534
    %610 = vmatpush1.msra.mxu0 %v533
    %611 = vmatprep.subr.mxu0 %v536
    %612 = vmatpush1.msra.mxu0 %v535
    %613 = vmatprep.subr.mxu0 %v538
    %614 = vmatpush1.msra.mxu0 %v537
    %615 = vmatprep.subr.mxu0 %v540
    %616 = vmatpush1.msra.mxu0 %v539
    %617 = vmatprep.subr.mxu0 %v542
    %618 = vmatpush1.msra.mxu0 %v541
    %619 = vmatprep.subr.mxu0 %v544
    %620 = vmatpush1.msra.mxu0 %v543
    %621 = vmatprep.subr.mxu0 %v546
    %622 = vmatpush1.msra.mxu0 %v545
    %623 = vmatprep.subr.mxu0 %v548
    %624 = vmatpush1.msra.mxu0 %v547
    %625 = vmatprep.subr.mxu0 %v550
    %626 = vmatpush1.msra.mxu0 %v549
    %627 = vmatprep.mubr.f32.mxu0 %v486
    %628 = vmatmul.mubr.f32.gmra.mrb[0].mxu0 %v485
    %v629 = vpop.f32.mrb[0].mxu0
    %v630 = vadd.f32 %v556, %v629
    %v631 = vpop.f32.mrb[0].mxu0
    %v632 = vadd.f32 %v560, %v631
    %633 = vdwg.mxu0
    %v634 = vmul.f32 %v630, 0.2
    %v635 = vmul.f32 %v632, 0.2
    %v636 = vmax.f32 %v630, %v634
    %v637 = vmax.f32 %v632, %v635
    %v638 = vld [vmem:[#allocation7] sm:$0xff]
    %v639 = vld [vmem:[#allocation7 + $0x8] sm:$0xff]
    %v640 = vld [vmem:[#allocation7 + $0x10] sm:$0xff]
    %v641 = vld [vmem:[#allocation7 + $0x18] sm:$0xff]
    %v642 = vld [vmem:[#allocation7 + $0x20] sm:$0xff]
    %v643 = vld [vmem:[#allocation7 + $0x28] sm:$0xff]
    %v644 = vld [vmem:[#allocation7 + $0x30] sm:$0xff]
    %v645 = vld [vmem:[#allocation7 + $0x38] sm:$0xff]
    %v646 = vld [vmem:[#allocation7 + $0x40] sm:$0xff]
    %v647 = vld [vmem:[#allocation7 + $0x48] sm:$0xff]
    %v648 = vld [vmem:[#allocation7 + $0x50] sm:$0xff]
    %v649 = vld [vmem:[#allocation7 + $0x58] sm:$0xff]
    %v650 = vld [vmem:[#allocation7 + $0x60] sm:$0xff]
    %v651 = vld [vmem:[#allocation7 + $0x68] sm:$0xff]
    %v652 = vld [vmem:[#allocation7 + $0x70] sm:$0xff]
    %v653 = vld [vmem:[#allocation7 + $0x78] sm:$0xff]
    %v654 = vld [vmem:[#allocation7 + $0x80] sm:$0xff]
    %v655 = vld [vmem:[#allocation7 + $0x88] sm:$0xff]
    %v656 = vld [vmem:[#allocation7 + $0x90] sm:$0xff]
    %v657 = vld [vmem:[#allocation7 + $0x98] sm:$0xff]
    %v658 = vld [vmem:[#allocation7 + $0xa0] sm:$0xff]
    %v659 = vld [vmem:[#allocation7 + $0xa8] sm:$0xff]
    %v660 = vld [vmem:[#allocation7 + $0xb0] sm:$0xff]
    %v661 = vld [vmem:[#allocation7 + $0xb8] sm:$0xff]
    %v662 = vld [vmem:[#allocation7 + $0xc0] sm:$0xff]
    %v663 = vld [vmem:[#allocation7 + $0xc8] sm:$0xff]
    %v664 = vld [vmem:[#allocation7 + $0xd0] sm:$0xff]
    %v665 = vld [vmem:[#allocation7 + $0xd8] sm:$0xff]
    %v666 = vld [vmem:[#allocation7 + $0xe0] sm:$0xff]
    %v667 = vld [vmem:[#allocation7 + $0xe8] sm:$0xff]
    %v668 = vld [vmem:[#allocation7 + $0xf0] sm:$0xff]
    %v669 = vld [vmem:[#allocation7 + $0xf8] sm:$0xff]
    %v670 = vld [vmem:[#allocation7 + $0x100] sm:$0xff]
    %v671 = vld [vmem:[#allocation7 + $0x108] sm:$0xff]
    %v672 = vld [vmem:[#allocation7 + $0x110] sm:$0xff]
    %v673 = vld [vmem:[#allocation7 + $0x118] sm:$0xff]
    %v674 = vld [vmem:[#allocation7 + $0x120] sm:$0xff]
    %v675 = vld [vmem:[#allocation7 + $0x128] sm:$0xff]
    %v676 = vld [vmem:[#allocation7 + $0x130] sm:$0xff]
    %v677 = vld [vmem:[#allocation7 + $0x138] sm:$0xff]
    %v678 = vld [vmem:[#allocation7 + $0x140] sm:$0xff]
    %v679 = vld [vmem:[#allocation7 + $0x148] sm:$0xff]
    %v680 = vld [vmem:[#allocation7 + $0x150] sm:$0xff]
    %v681 = vld [vmem:[#allocation7 + $0x158] sm:$0xff]
    %v682 = vld [vmem:[#allocation7 + $0x160] sm:$0xff]
    %v683 = vld [vmem:[#allocation7 + $0x168] sm:$0xff]
    %v684 = vld [vmem:[#allocation7 + $0x170] sm:$0xff]
    %v685 = vld [vmem:[#allocation7 + $0x178] sm:$0xff]
    %v686 = vld [vmem:[#allocation7 + $0x180] sm:$0xff]
    %v687 = vld [vmem:[#allocation7 + $0x188] sm:$0xff]
    %v688 = vld [vmem:[#allocation7 + $0x190] sm:$0xff]
    %v689 = vld [vmem:[#allocation7 + $0x198] sm:$0xff]
    %v690 = vld [vmem:[#allocation7 + $0x1a0] sm:$0xff]
    %v691 = vld [vmem:[#allocation7 + $0x1a8] sm:$0xff]
    %v692 = vld [vmem:[#allocation7 + $0x1b0] sm:$0xff]
    %v693 = vld [vmem:[#allocation7 + $0x1b8] sm:$0xff]
    %v694 = vld [vmem:[#allocation7 + $0x1c0] sm:$0xff]
    %v695 = vld [vmem:[#allocation7 + $0x1c8] sm:$0xff]
    %v696 = vld [vmem:[#allocation7 + $0x1d0] sm:$0xff]
    %v697 = vld [vmem:[#allocation7 + $0x1d8] sm:$0xff]
    %v698 = vld [vmem:[#allocation7 + $0x1e0] sm:$0xff]
    %v699 = vld [vmem:[#allocation7 + $0x1e8] sm:$0xff]
    %v700 = vld [vmem:[#allocation7 + $0x1f0] sm:$0xff]
    %v701 = vld [vmem:[#allocation7 + $0x1f8] sm:$0xff]
    %v702 = vld [vmem:[%s7] sm:$0x3]
    %v704 = vlaneseq
    %v705 = vshrl.u32 %v704, 7
    %v706 = vsub.s32 0, %v705
    %v707 = vrot.slane %v702, %v706
    %v708 = vlaneseq
    %v709 = vshrl.u32 %v708, 7
    %v710 = vsub.s32 1, %v709
    %v711 = vrot.slane %v702, %v710
    %714 = vmatprep.subr.mxu0 %v639
    %715 = vmatpush1.msra.mxu0 %v638
    %716 = vmatprep.subr.mxu0 %v641
    %717 = vmatpush1.msra.mxu0 %v640
    %718 = vmatprep.subr.mxu0 %v643
    %719 = vmatpush1.msra.mxu0 %v642
    %720 = vmatprep.subr.mxu0 %v645
    %721 = vmatpush1.msra.mxu0 %v644
    %722 = vmatprep.subr.mxu0 %v647
    %723 = vmatpush1.msra.mxu0 %v646
    %724 = vmatprep.subr.mxu0 %v649
    %725 = vmatpush1.msra.mxu0 %v648
    %726 = vmatprep.subr.mxu0 %v651
    %727 = vmatpush1.msra.mxu0 %v650
    %728 = vmatprep.subr.mxu0 %v653
    %729 = vmatpush1.msra.mxu0 %v652
    %730 = vmatprep.subr.mxu0 %v655
    %731 = vmatpush1.msra.mxu0 %v654
    %732 = vmatprep.subr.mxu0 %v657
    %733 = vmatpush1.msra.mxu0 %v656
    %734 = vmatprep.subr.mxu0 %v659
    %735 = vmatpush1.msra.mxu0 %v658
    %736 = vmatprep.subr.mxu0 %v661
    %737 = vmatpush1.msra.mxu0 %v660
    %738 = vmatprep.subr.mxu0 %v663
    %739 = vmatpush1.msra.mxu0 %v662
    %740 = vmatprep.subr.mxu0 %v665
    %741 = vmatpush1.msra.mxu0 %v664
    %742 = vmatprep.subr.mxu0 %v667
    %743 = vmatpush1.msra.mxu0 %v666
    %744 = vmatprep.subr.mxu0 %v669
    %745 = vmatpush1.msra.mxu0 %v668
    %746 = vmatprep.subr.mxu0 %v671
    %747 = vmatpush1.msra.mxu0 %v670
    %748 = vmatprep.subr.mxu0 %v673
    %749 = vmatpush1.msra.mxu0 %v672
    %750 = vmatprep.subr.mxu0 %v675
    %751 = vmatpush1.msra.mxu0 %v674
    %752 = vmatprep.subr.mxu0 %v677
    %753 = vmatpush1.msra.mxu0 %v676
    %754 = vmatprep.subr.mxu0 %v679
    %755 = vmatpush1.msra.mxu0 %v678
    %756 = vmatprep.subr.mxu0 %v681
    %757 = vmatpush1.msra.mxu0 %v680
    %758 = vmatprep.subr.mxu0 %v683
    %759 = vmatpush1.msra.mxu0 %v682
    %760 = vmatprep.subr.mxu0 %v685
    %761 = vmatpush1.msra.mxu0 %v684
    %762 = vmatprep.subr.mxu0 %v687
    %763 = vmatpush1.msra.mxu0 %v686
    %764 = vmatprep.subr.mxu0 %v689
    %765 = vmatpush1.msra.mxu0 %v688
    %766 = vmatprep.subr.mxu0 %v691
    %767 = vmatpush1.msra.mxu0 %v690
    %768 = vmatprep.subr.mxu0 %v693
    %769 = vmatpush1.msra.mxu0 %v692
    %770 = vmatprep.subr.mxu0 %v695
    %771 = vmatpush1.msra.mxu0 %v694
    %772 = vmatprep.subr.mxu0 %v697
    %773 = vmatpush1.msra.mxu0 %v696
    %774 = vmatprep.subr.mxu0 %v699
    %775 = vmatpush1.msra.mxu0 %v698
    %776 = vmatprep.subr.mxu0 %v701
    %777 = vmatpush1.msra.mxu0 %v700
    %778 = vmatprep.mubr.f32.mxu0 %v637
    %779 = vmatmul.mubr.f32.gmra.mrb[0].mxu0 %v636
    %v780 = vpop.f32.mrb[0].mxu0
    %v781 = vadd.f32 %v707, %v780
    %v782 = vpop.f32.mrb[0].mxu0
    %v783 = vadd.f32 %v711, %v782
    %784 = vdwg.mxu0
    %v785 = vadd.f32 %v485, %v781
    %v786 = vadd.f32 %v486, %v783
    %v787 = vmul.f32 %v785, 0.2
    %v788 = vmul.f32 %v786, 0.2
    %v789 = vmax.f32 %v785, %v787
    %v790 = vmax.f32 %v786, %v788
    %791 = vst [vmem:[%s8] sm:$0xff] %v789
    %792 = vst [vmem:[%s8 + $0x8] sm:$0xff] %v790
    // Predicated region
    $region50: #{kcs_layer_forward.1} parent=1 // pred_check
      _
    $region51: #{kcs_layer_forward.1} parent=1 // pred_check_branch
      %794 = sbr.rel (0) target = $region53
    $region52: #{kcs_layer_forward.1} parent=1 // pred_region
      _
    $region53: #{kcs_layer_forward.1} parent=1 // pred_fallthru
      _
    // Predicated region
    $region54: #{kcs_layer_forward.1} parent=1 // pred_check
      _
    $region55: #{kcs_layer_forward.1} parent=1 // pred_check_branch
      %796 = sbr.rel (0) target = $region57
    $region56: #{kcs_layer_forward.1} parent=1 // pred_region
      _
    $region57: #{kcs_layer_forward.1} parent=1 // pred_fallthru
      _
    %797 = vsyncpa [#allocation3], 1
    %798 = vsyncpa [#allocation5], 1
    %799 = vsyncpa [#allocation8], 1

</llo_original>
